<compile_context>
chip_gen: v6e
topology: v6e:2x2x1
jax: 0.10.0
libtpu: 0.0.40
codegen_flags: <defaults>
</compile_context>

<pallas_src>
import functools

import jax
import jax.numpy as jnp
from jax import lax
from jax.experimental import pallas as pl
from jax.experimental.pallas import tpu as pltpu


def _round_up(x, m):
    return ((x + m - 1) // m) * m


def _vmem_capacity_bytes():
    """Physical VMEM per TensorCore (128 MiB v5e/v6e, 64 MiB v7x)."""
    try:
        return int(pltpu.get_tpu_info().vmem_capacity_bytes)
    except Exception:
        return 64 << 20  # conservative default (v7x-sized)


# ---------------------------------------------------------------------------
# CLIP contrastive loss kernel (row-tiled, parallel grid, partial outputs)
# ---------------------------------------------------------------------------
def _clip_loss_kernel(img_ref, txt_ref, scale_ref, out_ref, *, tm, n_valid, n_pad):
    i = pl.program_id(0)
    scale = scale_ref[0]                               # SMEM scalar (f32)
    rs = pl.multiple_of(i * tm, tm)

    img_t = img_ref[pl.ds(rs, tm), :]                  # (TM, D) native dtype
    txt_t = txt_ref[pl.ds(rs, tm), :]                  # (TM, D) native dtype
    op_dtype = img_t.dtype

    # Apply logit_scale to the (TM, D) operands (O(N*D), not O(N^2)); keep the
    # MXU operands in the native dtype (bf16 feeds the MXU directly).
    img_s = (img_t.astype(jnp.float32) * scale).astype(op_dtype)
    txt_s = (txt_t.astype(jnp.float32) * scale).astype(op_dtype)

    # logits_per_image tile:  scale*img_tile @ txt_all.T   -> (TM, N)
    logits_img = lax.dot_general(
        img_s, txt_ref[...],
        dimension_numbers=(((1,), (1,)), ((), ())),
        preferred_element_type=jnp.float32)
    # logits_per_text tile:   scale*txt_tile @ img_all.T   -> (TM, N)
    logits_txt = lax.dot_general(
        txt_s, img_ref[...],
        dimension_numbers=(((1,), (1,)), ((), ())),
        preferred_element_type=jnp.float32)

    # Diagonal via scalar trace (identical for both directions): scale*<img_g, txt_g>
    diag = jnp.sum(img_s.astype(jnp.float32) * txt_t.astype(jnp.float32),
                   axis=1, keepdims=True)              # (TM, 1)

    if n_pad != n_valid:  # padded columns must not contribute to the lse
        col_ok = lax.broadcasted_iota(jnp.int32, (tm, n_pad), 1) < n_valid
        neg = jnp.float32(-1e30)
        logits_img = jnp.where(col_ok, logits_img, neg)
        logits_txt = jnp.where(col_ok, logits_txt, neg)

    # Lane-axis (last dim) log-sum-exp per direction.
    m_i = jnp.max(logits_img, axis=1, keepdims=True)
    lse_i = m_i + jnp.log(jnp.sum(jnp.exp(logits_img - m_i), axis=1, keepdims=True))
    m_t = jnp.max(logits_txt, axis=1, keepdims=True)
    lse_t = m_t + jnp.log(jnp.sum(jnp.exp(logits_txt - m_t), axis=1, keepdims=True))

    per_row = lse_i + lse_t - 2.0 * diag               # (TM, 1)
    if n_pad != n_valid:                               # drop padded rows
        rid = rs + lax.broadcasted_iota(jnp.int32, (tm, 1), 0)
        per_row = jnp.where(rid < n_valid, per_row, 0.0)

    out_ref[...] = jnp.sum(per_row, axis=0, keepdims=True).reshape(1, 1, 1)


def clip_loss_pallas(image_features, text_features, logit_scale):
    """(CE(scale*img@txt.T, arange) + CE(scale*txt@img.T, arange)) / 2."""
    N, D = image_features.shape
    elt = jnp.dtype(image_features.dtype).itemsize
    cap = _vmem_capacity_bytes()

    # Pick the row tile so features (resident, ~2x buffered) + ~8 f32 (TM, N)
    # intermediates fit in half of VMEM.
    n8 = _round_up(N, 8)
    feat_bytes = 2 * 2 * n8 * D * elt
    budget = cap // 2
    tm = 256
    while tm > 8 and feat_bytes + 8 * tm * n8 * 4 > budget:
        tm //= 2
    tm = max(8, min(tm, n8))
    n_pad = _round_up(N, tm)

    if n_pad != N:  # tiny one-off pad (O(N*D)); columns/rows masked in-kernel
        pad = n_pad - N
        image_features = jnp.pad(image_features, ((0, pad), (0, 0)))
        text_features = jnp.pad(text_features, ((0, pad), (0, 0)))

    num_tiles = n_pad // tm
    scale_arr = jnp.reshape(jnp.asarray(logit_scale, jnp.float32), (1,))
    vmem_limit = int(cap * 0.85)

    kernel = functools.partial(_clip_loss_kernel, tm=tm, n_valid=N, n_pad=n_pad)

    partials = pl.pallas_call(
        kernel,
        out_shape=jax.ShapeDtypeStruct((num_tiles, 1, 1), jnp.float32),
        grid_spec=pltpu.PrefetchScalarGridSpec(
            num_scalar_prefetch=0,
            grid=(num_tiles,),
            in_specs=[
                pl.BlockSpec((n_pad, D), lambda i: (0, 0)),             # image (resident)
                pl.BlockSpec((n_pad, D), lambda i: (0, 0)),             # text  (resident)
                pl.BlockSpec(memory_space=pltpu.MemorySpace.SMEM),      # logit_scale
            ],
            out_specs=pl.BlockSpec((1, 1, 1), lambda i: (i, 0, 0)),
        ),
        compiler_params=pltpu.CompilerParams(
            dimension_semantics=("parallel",),
            vmem_limit_bytes=vmem_limit),
    )(image_features, text_features, scale_arr)

    return jnp.sum(partials) * (0.5 / N)


# ---------------------------------------------------------------------------
# Caption (token) cross-entropy kernel with ignore_index (byte-budgeted tiles)
# ---------------------------------------------------------------------------
def _caption_loss_kernel(labels_ref, logits_ref, out_ref, *, pad_id, n_rows, tr):
    i = pl.program_id(0)

    logits = logits_ref[...].astype(jnp.float32)       # (TR, V)
    lab = labels_ref[...]                              # (TR, 1) int32
    v = logits.shape[1]

    col = lax.broadcasted_iota(jnp.int32, (tr, v), 1)
    onehot = col == lab                                # broadcast along lanes

    m = jnp.max(logits, axis=1, keepdims=True)                                  # (TR, 1)
    lse = m + jnp.log(jnp.sum(jnp.exp(logits - m), axis=1, keepdims=True))      # (TR, 1)
    picked = jnp.sum(jnp.where(onehot, logits, 0.0), axis=1, keepdims=True)     # (TR, 1)

    valid = lab != pad_id
    if n_rows % tr != 0:  # tail tile: mask rows past the end of the array
        rid = i * tr + lax.broadcasted_iota(jnp.int32, (tr, 1), 0)
        valid = jnp.logical_and(valid, rid < n_rows)

    per_row = jnp.where(valid, lse - picked, 0.0)
    row_sum = jnp.sum(per_row, axis=0, keepdims=True)                     # (1, 1)
    row_cnt = jnp.sum(valid.astype(jnp.float32), axis=0, keepdims=True)   # (1, 1)
    out_ref[...] = jnp.concatenate([row_sum, row_cnt], axis=1).reshape(1, 1, 2)


def _caption_row_tile(r, v, elt, cap):
    """Largest multiple-of-8 row tile whose streamed input (2x buffered) plus
    ~6 word-sized in-kernel intermediates fit in ~60% of VMEM."""
    budget = int(cap * 0.6)
    per_row_bytes = v * (2 * elt + 6 * 4)
    tr = budget // max(per_row_bytes, 1)
    tr_cap = (r // 8) * 8 if r >= 8 else 8
    tr = min(tr, 1024, tr_cap)
    tr = max(8, (tr // 8) * 8)
    return tr


def caption_loss_pallas(logits, labels, *, pad_id=0):
    """nn.CrossEntropyLoss(ignore_index=pad_id)(logits.permute(0,2,1), labels)."""
    B, L, V = logits.shape
    R = B * L
    logits2d = logits.reshape(R, V)                    # keep native dtype (no f32 upcast)
    labels2d = labels.reshape(R, 1).astype(jnp.int32)

    elt = jnp.dtype(logits.dtype).itemsize
    cap = _vmem_capacity_bytes()
    TR = _caption_row_tile(R, V, elt, cap)
    steps = -(-R // TR)                                # cdiv, tail masked in-kernel
    vmem_limit = int(cap * 0.85)

    kernel = functools.partial(_caption_loss_kernel, pad_id=pad_id, n_rows=R, tr=TR)

    partials = pl.pallas_call(
        kernel,
        out_shape=jax.ShapeDtypeStruct((steps, 1, 2), jnp.float32),
        grid_spec=pltpu.PrefetchScalarGridSpec(
            num_scalar_prefetch=0,
            grid=(steps,),
            in_specs=[
                pl.BlockSpec((TR, 1), lambda i: (i, 0)),   # labels
                pl.BlockSpec((TR, V), lambda i: (i, 0)),   # logits (native dtype)
            ],
            out_specs=pl.BlockSpec((1, 1, 2), lambda i: (i, 0, 0)),
        ),
        compiler_params=pltpu.CompilerParams(
            dimension_semantics=("parallel",),
            vmem_limit_bytes=vmem_limit),
    )(labels2d, logits2d)

    total = jnp.sum(partials[:, 0, 0])
    count = jnp.sum(partials[:, 0, 1])
    # TODO(synk): count == 0 (no non-pad tokens) yields NaN, matching
    # nn.CrossEntropyLoss(ignore_index=pad_id) semantics.
    return total / count


# ---------------------------------------------------------------------------
# CoCaLoss forward
# ---------------------------------------------------------------------------
def coca_loss(image_features, text_features, logits, labels, logit_scale,
              *, caption_loss_weight, clip_loss_weight, pad_id=0):
    if clip_loss_weight:
        clip_loss = clip_loss_weight * clip_loss_pallas(
            image_features, text_features, logit_scale)
    else:
        clip_loss = jnp.float32(0.0)

    caption_loss = caption_loss_weight * caption_loss_pallas(
        logits, labels, pad_id=pad_id)
    return clip_loss, caption_loss


# ---------------------------------------------------------------------------
# Pure-JAX reference (mirrors the PyTorch module, world_size == 1)
# ---------------------------------------------------------------------------
def reference_coca_loss(image_features, text_features, logits, labels, logit_scale,
                        *, caption_loss_weight, clip_loss_weight, pad_id=0):
    N = image_features.shape[0]
    lpi = logit_scale * image_features @ text_features.T
    lpt = logit_scale * text_features @ image_features.T
    tgt = jnp.arange(N)

    def ce(lg, t):
        ls = jax.nn.log_softmax(lg, axis=-1)
        return -jnp.mean(ls[jnp.arange(lg.shape[0]), t])

    if clip_loss_weight:
        clip_l = clip_loss_weight * 0.5 * (ce(lpi, tgt) + ce(lpt, tgt))
    else:
        clip_l = jnp.float32(0.0)

    B, L, V = logits.shape
    lg = logits.reshape(-1, V)
    lb = labels.reshape(-1)
    ls = jax.nn.log_softmax(lg, axis=-1)
    nll = -ls[jnp.arange(lg.shape[0]), lb]
    valid = (lb != pad_id).astype(jnp.float32)
    cap_l = caption_loss_weight * jnp.sum(nll * valid) / jnp.sum(valid)
    return clip_l, cap_l


def _run_case(key, N, D, B, L, V, pad_id, caption_loss_weight, clip_loss_weight):
    k1, k2, k3, k4 = jax.random.split(key, 4)
    image_features = jax.random.normal(k1, (N, D), jnp.float32)
    text_features = jax.random.normal(k2, (N, D), jnp.float32)
    image_features = image_features / jnp.linalg.norm(image_features, axis=-1, keepdims=True)
    text_features = text_features / jnp.linalg.norm(text_features, axis=-1, keepdims=True)
    logit_scale = jnp.float32(10.0)

    cap_logits = jax.random.normal(k3, (B, L, V), jnp.float32)
    cap_labels = jax.random.randint(k4, (B, L), 0, V, dtype=jnp.int32)
    cap_labels = cap_labels.at[:, 0].set(pad_id)   # make sure some tokens are ignored

    clip_l, cap_l = coca_loss(
        image_features, text_features, cap_logits, cap_labels, logit_scale,
        caption_loss_weight=caption_loss_weight,
        clip_loss_weight=clip_loss_weight,
        pad_id=pad_id)
    clip_l, cap_l = jax.block_until_ready((clip_l, cap_l))

    ref_clip, ref_cap = reference_coca_loss(
        image_features, text_features, cap_logits, cap_labels, logit_scale,
        caption_loss_weight=caption_loss_weight,
        clip_loss_weight=clip_loss_weight,
        pad_id=pad_id)

    assert jnp.isfinite(clip_l) and jnp.isfinite(cap_l)
    assert jnp.allclose(clip_l, ref_clip, atol=1e-4, rtol=1e-4), (clip_l, ref_clip)
    assert jnp.allclose(cap_l, ref_cap, atol=1e-4, rtol=1e-4), (cap_l, ref_cap)


if __name__ == "__main__":
    key = jax.random.PRNGKey(0)
    k_a, k_b = jax.random.split(key)

    # Case 1: aligned shapes (no masking / padding paths).
    _run_case(k_a, N=8, D=32, B=2, L=8, V=32, pad_id=0,
              caption_loss_weight=2.0, clip_loss_weight=1.0)

    # Case 2: unaligned shapes (exercises CLIP row/column padding masks and the
    # caption cdiv + tail-row mask path).
    _run_case(k_b, N=12, D=32, B=2, L=7, V=32, pad_id=0,
              caption_loss_weight=0.5, clip_loss_weight=1.5)

    print("KERNEL_OK")
</pallas_src>

<mosaic_0001>
module attributes {stable_mosaic.version = 11 : i64} {
  func.func @_clip_loss_kernel(%arg0: i32, %arg1: memref<8x32xf32, #tpu.memory_space<vmem>>, %arg2: memref<8x32xf32, #tpu.memory_space<vmem>>, %arg3: memref<1xf32, #tpu.memory_space<smem>>, %arg4: memref<1x1x1xf32, #tpu.memory_space<vmem>>) attributes {dimension_semantics = [#tpu.dimension_semantics<parallel>], iteration_bounds = array<i64: 1>, scalar_prefetch = 0 : i64, scratch_operands = 0 : i64, tpu.core_type = #tpu.core_type<tc>, window_params = [{pipeline_mode = #tpu.pipeline_mode<synchronous>, transform_indices = @transform_0, window_bounds = array<i64: 8, 32>}, {pipeline_mode = #tpu.pipeline_mode<synchronous>, transform_indices = @transform_1, window_bounds = array<i64: 8, 32>}, {transform_indices = @transform_2, window_bounds = array<i64: 1>}, {transform_indices = @transform_3, window_bounds = array<i64: 1, 1, 1>}]} {
    %c0 = arith.constant 0 : index
    %0 = memref.load %arg3[%c0] : memref<1xf32, #tpu.memory_space<smem>>
    %c8_i32 = arith.constant 8 : i32
    %1 = arith.muli %arg0, %c8_i32 : i32
    %2 = tpu.assume_multiple %1, 8 : i32
    %3 = arith.index_cast %2 : i32 to index
    %c0_0 = arith.constant 0 : index
    %4 = vector.load %arg1[%3, %c0_0] : memref<8x32xf32, #tpu.memory_space<vmem>>, vector<8x32xf32>
    %5 = arith.index_cast %2 : i32 to index
    %c0_1 = arith.constant 0 : index
    %6 = vector.load %arg2[%5, %c0_1] : memref<8x32xf32, #tpu.memory_space<vmem>>, vector<8x32xf32>
    %7 = vector.broadcast %0 : f32 to vector<8x32xf32>
    %8 = arith.mulf %4, %7 : vector<8x32xf32>
    %9 = vector.broadcast %0 : f32 to vector<8x32xf32>
    %10 = arith.mulf %6, %9 : vector<8x32xf32>
    %c0_2 = arith.constant 0 : index
    %c0_3 = arith.constant 0 : index
    %11 = vector.load %arg2[%c0_2, %c0_3] : memref<8x32xf32, #tpu.memory_space<vmem>>, vector<8x32xf32>
    %cst = arith.constant dense<0.000000e+00> : vector<8x8xf32>
    %12 = tpu.matmul %8, %11, %cst {dimension_numbers = #tpu.dot_dimension_numbers<[1], [1], [0], [0], [0, 0, 1, 0], [], []>} : vector<8x32xf32>, vector<8x32xf32>, vector<8x8xf32> -> vector<8x8xf32>
    %c0_4 = arith.constant 0 : index
    %c0_5 = arith.constant 0 : index
    %13 = vector.load %arg1[%c0_4, %c0_5] : memref<8x32xf32, #tpu.memory_space<vmem>>, vector<8x32xf32>
    %cst_6 = arith.constant dense<0.000000e+00> : vector<8x8xf32>
    %14 = tpu.matmul %10, %13, %cst_6 {dimension_numbers = #tpu.dot_dimension_numbers<[1], [1], [0], [0], [0, 0, 1, 0], [], []>} : vector<8x32xf32>, vector<8x32xf32>, vector<8x8xf32> -> vector<8x8xf32>
    %15 = arith.mulf %8, %6 : vector<8x32xf32>
    %cst_7 = arith.constant dense<0.000000e+00> : vector<8xf32>
    %16 = vector.multi_reduction <add>, %15, %cst_7 [1] : vector<8x32xf32> to vector<8xf32>
    %17 = vector.shape_cast %16 : vector<8xf32> to vector<8x1xf32>
    %cst_8 = arith.constant dense<0xFF800000> : vector<8xf32>
    %18 = vector.multi_reduction <maximumf>, %12, %cst_8 [1] : vector<8x8xf32> to vector<8xf32>
    %19 = vector.shape_cast %18 : vector<8xf32> to vector<8x1xf32>
    %20 = vector.broadcast %19 : vector<8x1xf32> to vector<8x8xf32>
    %21 = arith.subf %12, %20 : vector<8x8xf32>
    %22 = math.exp %21 : vector<8x8xf32>
    %cst_9 = arith.constant dense<0.000000e+00> : vector<8xf32>
    %23 = vector.multi_reduction <add>, %22, %cst_9 [1] : vector<8x8xf32> to vector<8xf32>
    %24 = vector.shape_cast %23 : vector<8xf32> to vector<8x1xf32>
    %25 = math.log %24 : vector<8x1xf32>
    %26 = arith.addf %19, %25 : vector<8x1xf32>
    %cst_10 = arith.constant dense<0xFF800000> : vector<8xf32>
    %27 = vector.multi_reduction <maximumf>, %14, %cst_10 [1] : vector<8x8xf32> to vector<8xf32>
    %28 = vector.shape_cast %27 : vector<8xf32> to vector<8x1xf32>
    %29 = vector.broadcast %28 : vector<8x1xf32> to vector<8x8xf32>
    %30 = arith.subf %14, %29 : vector<8x8xf32>
    %31 = math.exp %30 : vector<8x8xf32>
    %cst_11 = arith.constant dense<0.000000e+00> : vector<8xf32>
    %32 = vector.multi_reduction <add>, %31, %cst_11 [1] : vector<8x8xf32> to vector<8xf32>
    %33 = vector.shape_cast %32 : vector<8xf32> to vector<8x1xf32>
    %34 = math.log %33 : vector<8x1xf32>
    %35 = arith.addf %28, %34 : vector<8x1xf32>
    %36 = arith.addf %26, %35 : vector<8x1xf32>
    %cst_12 = arith.constant 2.000000e+00 : f32
    %37 = vector.broadcast %cst_12 : f32 to vector<8x1xf32>
    %38 = arith.mulf %37, %17 : vector<8x1xf32>
    %39 = arith.subf %36, %38 : vector<8x1xf32>
    %cst_13 = arith.constant dense<0.000000e+00> : vector<1xf32>
    %40 = vector.multi_reduction <add>, %39, %cst_13 [0] : vector<8x1xf32> to vector<1xf32>
    %41 = vector.shape_cast %40 : vector<1xf32> to vector<1x1xf32>
    %42 = vector.shape_cast %41 : vector<1x1xf32> to vector<1x1x1xf32>
    %c0_14 = arith.constant 0 : index
    %c0_15 = arith.constant 0 : index
    %c0_16 = arith.constant 0 : index
    %43 = vector.load %arg4[%c0_14, %c0_15, %c0_16] : memref<1x1x1xf32, #tpu.memory_space<vmem>>, vector<1x1x1xf32>
    tpu.vector_store %arg4[%c0_14, %c0_15, %c0_16], %42 {strides = array<i32>} : memref<1x1x1xf32, #tpu.memory_space<vmem>>, vector<1x1x1xf32>,
    return
  }
  func.func @transform_0(%arg0: i32) -> (i32, i32) {
    %c0_i32 = arith.constant 0 : i32
    %c0_i32_0 = arith.constant 0 : i32
    %c0_i32_1 = arith.constant 0 : i32
    return %c0_i32, %c0_i32_0 : i32, i32
  }
  func.func @transform_1(%arg0: i32) -> (i32, i32) {
    %c0_i32 = arith.constant 0 : i32
    %c0_i32_0 = arith.constant 0 : i32
    %c0_i32_1 = arith.constant 0 : i32
    return %c0_i32, %c0_i32_0 : i32, i32
  }
  func.func @transform_2(%arg0: i32) -> i32 {
    %c0_i32 = arith.constant 0 : i32
    %c0_i32_0 = arith.constant 0 : i32
    return %c0_i32 : i32
  }
  func.func @transform_3(%arg0: i32) -> (i32, i32, i32) {
    %c0_i32 = arith.constant 0 : i32
    %c0_i32_0 = arith.constant 0 : i32
    %c0_i32_1 = arith.constant 0 : i32
    return %arg0, %c0_i32, %c0_i32_0 : i32, i32, i32
  }
}

</mosaic_0001>

<llo_original>
// kernel: tpu_custom_call.1
$region0: #{tpu_custom_call.1}
  #allocation0 [shape = 'u32[]', space=smem, size = 0x4, offset = 0x4, fixed_abs, tag = 'smem constant byte address 0x4 - core index']
  #allocation1 [shape = 'u32[144,128]{1,0:T(1,128)}', space=vmem, size = 0x12000, scoped, tag = 'internal scratch']
  #allocation2 [shape = 'f32[1]{0:T(128)S(6)}', space=smem, size = 0x200, scoped, tag = 'scoped memory for tpu_custom_call.1']
  %s0 = inlined_call_operand.hbm [shape: f32[8,32], index: 0, kind: input, shape index: {}]
  %s1 = inlined_call_operand.hbm [shape: f32[8,32], index: 1, kind: input, shape index: {}]
  %s2 = inlined_call_operand.<no memory space> [shape: f32[1], index: 2, kind: input, shape index: {}]
  %s3 = inlined_call_operand.hbm [shape: f32[1,1,1], index: 3, kind: output, shape index: {}]
  %s4 = sld [smem:[#allocation0]]
  $region30: #{tpu_custom_call.1} parent=0
    _
  %s6 = ssub.s32 1, %s4
  %s7 = scalar_select 0, %s6, %s4
  %8 = sst [smem:[#allocation2]] %s2
  $region1: #{tpu_custom_call.1} parent=0
    #allocation3 [shape = 'u8[4096]{0}', space=vmem, size = 0x1000, scoped, tag = 'input window, operand 0, single buffered']
    #allocation4 [shape = 's32[1]{0}', space=sflag, size = 0x4, scoped, tag = 'scoped memory for tpu_custom_call.1']
    #allocation5 [shape = 's32[1]{0}', space=sflag, size = 0x4, scoped, tag = 'scoped memory for tpu_custom_call.1']
    #allocation6 [shape = 'u8[4096]{0}', space=vmem, size = 0x1000, scoped, tag = 'input window, operand 1, single buffered']
    #allocation7 [shape = 's32[1]{0}', space=sflag, size = 0x4, scoped, tag = 'scoped memory for tpu_custom_call.1']
    #allocation8 [shape = 'u8[512]{0}', space=vmem, size = 0x400, scoped, tag = 'output window, operand 0, single buffered']
    %9 = vsyncpa [#allocation4], 0
    %10 = vsyncpa [#allocation7], 0
    %11 = vsyncpa [#allocation5], 0
    // Predicated region
    $region2: #{tpu_custom_call.1} parent=1 // pred_check
      _
    $region3: #{tpu_custom_call.1} parent=1 // pred_check_branch
      %13 = sbr.rel (0) target = $region5
    $region4: #{tpu_custom_call.1} parent=1 // pred_region
      %s15 = ssub.s32 128, 128
      %16 = vsyncadd [#allocation4], %s15
      %s18 = sshll.u32 [#allocation3], 4
      %s19 = int_to_ptr.vmem [resolvable:$true] %s18
      %21 = dma.hbm_to_vmem [thread:$0]  %s0, 128, %s19, [#allocation4]
    $region5: #{tpu_custom_call.1} parent=1 // pred_fallthru
      _
    // Predicated region
    $region6: #{tpu_custom_call.1} parent=1 // pred_check
      _
    $region7: #{tpu_custom_call.1} parent=1 // pred_check_branch
      %23 = sbr.rel (0) target = $region9
    $region8: #{tpu_custom_call.1} parent=1 // pred_region
      %s25 = ssub.s32 128, 128
      %26 = vsyncadd [#allocation7], %s25
      %s28 = sshll.u32 [#allocation6], 4
      %s29 = int_to_ptr.vmem [resolvable:$true] %s28
      %31 = dma.hbm_to_vmem [thread:$0]  %s1, 128, %s29, [#allocation7]
    $region9: #{tpu_custom_call.1} parent=1 // pred_fallthru
      _
    // Predicated region
    $region10: #{tpu_custom_call.1} parent=1 // pred_check
      _
    $region11: #{tpu_custom_call.1} parent=1 // pred_check_branch
      %33 = sbr.rel (0) target = $region13
    $region12: #{tpu_custom_call.1} parent=1 // pred_region
      _
    $region13: #{tpu_custom_call.1} parent=1 // pred_fallthru
      _
    // Predicated region
    $region14: #{tpu_custom_call.1} parent=1 // pred_check
      _
    $region15: #{tpu_custom_call.1} parent=1 // pred_check_branch
      %35 = sbr.rel (0) target = $region17
    $region16: #{tpu_custom_call.1} parent=1 // pred_region
      %36 = dma.done [#allocation4], 128
    $region17: #{tpu_custom_call.1} parent=1 // pred_fallthru
      _
    // Predicated region
    $region18: #{tpu_custom_call.1} parent=1 // pred_check
      _
    $region19: #{tpu_custom_call.1} parent=1 // pred_check_branch
      %38 = sbr.rel (0) target = $region21
    $region20: #{tpu_custom_call.1} parent=1 // pred_region
      %39 = dma.done [#allocation7], 128
    $region21: #{tpu_custom_call.1} parent=1 // pred_fallthru
      _
    %s40 = sld [smem:[#allocation2]]
    %s41 = smul.u32 0, 8
    %s42 = scalar_lea.vmem [#allocation3], %s41
    %v43 = vld [vmem:[%s42] sm:$0xff]
    %s44 = scalar_lea.vmem [#allocation6], %s41
    %v45 = vld [vmem:[%s44] sm:$0xff]
    %v46 = vstv %s40
    %v47 = vmul.f32 %v43, %v46
    %v48 = vmul.f32 %v45, %v46
    %v49 = vld [vmem:[#allocation6] sm:$0xff]
    %vm50 = vcmask 261120
    %v52 = vsel %vm50, %v47, 0
    %v55 = vsel %vm50, %v49, 0
    %57 = vmatprep.subr.mxu0 0.0
    %58 = vmatpush1.xpose.msra.mxu0 0.0
    %59 = vmatprep.subr.mxu0 0.0
    %60 = vmatpush1.xpose.msra.mxu0 0.0
    %61 = vmatprep.subr.mxu0 0.0
    %62 = vmatpush1.xpose.msra.mxu0 0.0
    %63 = vmatprep.subr.mxu0 0.0
    %64 = vmatpush1.xpose.msra.mxu0 0.0
    %65 = vmatprep.subr.mxu0 0.0
    %66 = vmatpush1.xpose.msra.mxu0 0.0
    %67 = vmatprep.subr.mxu0 0.0
    %68 = vmatpush1.xpose.msra.mxu0 0.0
    %69 = vmatprep.subr.mxu0 0.0
    %70 = vmatpush1.xpose.msra.mxu0 0.0
    %71 = vmatprep.subr.mxu0 0.0
    %72 = vmatpush1.xpose.msra.mxu0 0.0
    %73 = vmatprep.subr.mxu0 0.0
    %74 = vmatpush1.xpose.msra.mxu0 0.0
    %75 = vmatprep.subr.mxu0 0.0
    %76 = vmatpush1.xpose.msra.mxu0 0.0
    %77 = vmatprep.subr.mxu0 0.0
    %78 = vmatpush1.xpose.msra.mxu0 0.0
    %79 = vmatprep.subr.mxu0 0.0
    %80 = vmatpush1.xpose.msra.mxu0 0.0
    %81 = vmatprep.subr.mxu0 0.0
    %82 = vmatpush1.xpose.msra.mxu0 0.0
    %83 = vmatprep.subr.mxu0 0.0
    %84 = vmatpush1.xpose.msra.mxu0 0.0
    %85 = vmatprep.subr.mxu0 0.0
    %86 = vmatpush1.xpose.msra.mxu0 0.0
    %87 = vmatprep.subr.mxu0 0.0
    %88 = vmatpush1.xpose.msra.mxu0 %v55
    %89 = vmatprep.subr.mxu0 0.0
    %90 = vmatpush2.xpose.msra.mxu0 0.0
    %91 = vmatprep.subr.mxu0 0.0
    %92 = vmatpush2.xpose.msra.mxu0 0.0
    %93 = vmatprep.subr.mxu0 0.0
    %94 = vmatpush2.xpose.msra.mxu0 0.0
    %95 = vmatprep.subr.mxu0 0.0
    %96 = vmatpush2.xpose.msra.mxu0 0.0
    %97 = vmatprep.subr.mxu0 0.0
    %98 = vmatpush2.xpose.msra.mxu0 0.0
    %99 = vmatprep.subr.mxu0 0.0
    %100 = vmatpush2.xpose.msra.mxu0 0.0
    %101 = vmatprep.subr.mxu0 0.0
    %102 = vmatpush2.xpose.msra.mxu0 0.0
    %103 = vmatprep.subr.mxu0 0.0
    %104 = vmatpush2.xpose.msra.mxu0 0.0
    %105 = vmatprep.subr.mxu0 0.0
    %106 = vmatpush2.xpose.msra.mxu0 0.0
    %107 = vmatprep.subr.mxu0 0.0
    %108 = vmatpush2.xpose.msra.mxu0 0.0
    %109 = vmatprep.subr.mxu0 0.0
    %110 = vmatpush2.xpose.msra.mxu0 0.0
    %111 = vmatprep.subr.mxu0 0.0
    %112 = vmatpush2.xpose.msra.mxu0 0.0
    %113 = vmatprep.subr.mxu0 0.0
    %114 = vmatpush2.xpose.msra.mxu0 0.0
    %115 = vmatprep.subr.mxu0 0.0
    %116 = vmatpush2.xpose.msra.mxu0 0.0
    %117 = vmatprep.subr.mxu0 0.0
    %118 = vmatpush2.xpose.msra.mxu0 0.0
    %119 = vmatprep.subr.mxu0 0.0
    %120 = vmatpush2.xpose.msra.mxu0 0.0
    %121 = vmatprep.mubr.f32.mxu0 0.0
    %122 = vmatmul.mubr.f32.gmra.mxu0 %v52
    %v123 = vpop.f32.mrf.mxu0
    %v124 = vadd.f32 0.0, %v123
    %v125 = vpop.f32.mrf.mxu0
    %126 = vdwg.mxu0
    %v127 = vld [vmem:[#allocation3] sm:$0xff]
    %v129 = vsel %vm50, %v48, 0
    %v132 = vsel %vm50, %v127, 0
    %134 = vmatprep.subr.mxu0 0.0
    %135 = vmatpush1.xpose.msra.mxu0 0.0
    %136 = vmatprep.subr.mxu0 0.0
    %137 = vmatpush1.xpose.msra.mxu0 0.0
    %138 = vmatprep.subr.mxu0 0.0
    %139 = vmatpush1.xpose.msra.mxu0 0.0
    %140 = vmatprep.subr.mxu0 0.0
    %141 = vmatpush1.xpose.msra.mxu0 0.0
    %142 = vmatprep.subr.mxu0 0.0
    %143 = vmatpush1.xpose.msra.mxu0 0.0
    %144 = vmatprep.subr.mxu0 0.0
    %145 = vmatpush1.xpose.msra.mxu0 0.0
    %146 = vmatprep.subr.mxu0 0.0
    %147 = vmatpush1.xpose.msra.mxu0 0.0
    %148 = vmatprep.subr.mxu0 0.0
    %149 = vmatpush1.xpose.msra.mxu0 0.0
    %150 = vmatprep.subr.mxu0 0.0
    %151 = vmatpush1.xpose.msra.mxu0 0.0
    %152 = vmatprep.subr.mxu0 0.0
    %153 = vmatpush1.xpose.msra.mxu0 0.0
    %154 = vmatprep.subr.mxu0 0.0
    %155 = vmatpush1.xpose.msra.mxu0 0.0
    %156 = vmatprep.subr.mxu0 0.0
    %157 = vmatpush1.xpose.msra.mxu0 0.0
    %158 = vmatprep.subr.mxu0 0.0
    %159 = vmatpush1.xpose.msra.mxu0 0.0
    %160 = vmatprep.subr.mxu0 0.0
    %161 = vmatpush1.xpose.msra.mxu0 0.0
    %162 = vmatprep.subr.mxu0 0.0
    %163 = vmatpush1.xpose.msra.mxu0 0.0
    %164 = vmatprep.subr.mxu0 0.0
    %165 = vmatpush1.xpose.msra.mxu0 %v132
    %166 = vmatprep.subr.mxu0 0.0
    %167 = vmatpush2.xpose.msra.mxu0 0.0
    %168 = vmatprep.subr.mxu0 0.0
    %169 = vmatpush2.xpose.msra.mxu0 0.0
    %170 = vmatprep.subr.mxu0 0.0
    %171 = vmatpush2.xpose.msra.mxu0 0.0
    %172 = vmatprep.subr.mxu0 0.0
    %173 = vmatpush2.xpose.msra.mxu0 0.0
    %174 = vmatprep.subr.mxu0 0.0
    %175 = vmatpush2.xpose.msra.mxu0 0.0
    %176 = vmatprep.subr.mxu0 0.0
    %177 = vmatpush2.xpose.msra.mxu0 0.0
    %178 = vmatprep.subr.mxu0 0.0
    %179 = vmatpush2.xpose.msra.mxu0 0.0
    %180 = vmatprep.subr.mxu0 0.0
    %181 = vmatpush2.xpose.msra.mxu0 0.0
    %182 = vmatprep.subr.mxu0 0.0
    %183 = vmatpush2.xpose.msra.mxu0 0.0
    %184 = vmatprep.subr.mxu0 0.0
    %185 = vmatpush2.xpose.msra.mxu0 0.0
    %186 = vmatprep.subr.mxu0 0.0
    %187 = vmatpush2.xpose.msra.mxu0 0.0
    %188 = vmatprep.subr.mxu0 0.0
    %189 = vmatpush2.xpose.msra.mxu0 0.0
    %190 = vmatprep.subr.mxu0 0.0
    %191 = vmatpush2.xpose.msra.mxu0 0.0
    %192 = vmatprep.subr.mxu0 0.0
    %193 = vmatpush2.xpose.msra.mxu0 0.0
    %194 = vmatprep.subr.mxu0 0.0
    %195 = vmatpush2.xpose.msra.mxu0 0.0
    %196 = vmatprep.subr.mxu0 0.0
    %197 = vmatpush2.xpose.msra.mxu0 0.0
    %198 = vmatprep.mubr.f32.mxu0 0.0
    %199 = vmatmul.mubr.f32.gmra.mxu0 %v129
    %v200 = vpop.f32.mrf.mxu0
    %v201 = vadd.f32 0.0, %v200
    %v202 = vpop.f32.mrf.mxu0
    %203 = vdwg.mxu0
    %v204 = vmul.f32 %v47, %v45
    %v205 = vsel %vm50, %v204, 0.0
    %206 = vadd.xlane.f32.xlu0 %v205
    %v207 = vpop.xlane.xlu0 %206
    %vm208 = vcmask 64512
    %v209 = vsel %vm208, %v124, -inf
    %210 = vmax.xlane.f32.xlu0 %v209
    %v211 = vpop.xlane.xlu0 %210
    %v212 = vsub.f32 %v124, %v211
    %v213 = vmul.f32 %v212, 1.442695
    %v214 = vpow.pop %v213
    %v215 = vsel %vm208, %v214, 0.0
    %216 = vadd.xlane.f32.xlu0 %v215
    %v217 = vpop.xlane.xlu0 %216
    %v218 = vlog2.pop %v217
    %v219 = vmul.f32 %v218, 0.6931472
    %v220 = vadd.f32 %v211, %v219
    %v221 = vsel %vm208, %v201, -inf
    %222 = vmax.xlane.f32.xlu0 %v221
    %v223 = vpop.xlane.xlu0 %222
    %v224 = vsub.f32 %v201, %v223
    %v225 = vmul.f32 %v224, 1.442695
    %v226 = vpow.pop %v225
    %v227 = vsel %vm208, %v226, 0.0
    %228 = vadd.xlane.f32.xlu0 %v227
    %v229 = vpop.xlane.xlu0 %228
    %v230 = vlog2.pop %v229
    %v231 = vmul.f32 %v230, 0.6931472
    %v232 = vadd.f32 %v223, %v231
    %v233 = vadd.f32 %v220, %v232
    %v234 = vmul.f32 %v207, 2.0
    %v235 = vsub.f32 %v233, %v234
    %v236 = vrot.slane %v235, 4
    %v237 = vadd.f32 %v235, %v236
    %v238 = vrot.slane %v237, 2
    %v239 = vadd.f32 %v237, %v238
    %v240 = vrot.slane %v239, 1
    %v241 = vadd.f32 %v239, %v240
    %vm242 = vcmask 0
    %243 = vst.msk [vmem:[#allocation8] sm:$0x1] %vm242, %v241
    // Predicated region
    $region22: #{tpu_custom_call.1} parent=1 // pred_check
      _
    $region23: #{tpu_custom_call.1} parent=1 // pred_check_branch
      %245 = sbr.rel (0) target = $region25
    $region24: #{tpu_custom_call.1} parent=1 // pred_region
      %s247 = ssub.s32 16, 16
      %248 = vsyncadd [#allocation5], %s247
      %s250 = sshll.u32 [#allocation8], 4
      %s251 = int_to_ptr.vmem [resolvable:$true] %s250
      %253 = dma.vmem_to_hbm [thread:$0]  %s251, 16, %s3, [#allocation5]
    $region25: #{tpu_custom_call.1} parent=1 // pred_fallthru
      _
    // Predicated region
    $region26: #{tpu_custom_call.1} parent=1 // pred_check
      _
    $region27: #{tpu_custom_call.1} parent=1 // pred_check_branch
      %255 = sbr.rel (0) target = $region29
    $region28: #{tpu_custom_call.1} parent=1 // pred_region
      %256 = dma.done [#allocation5], 16
    $region29: #{tpu_custom_call.1} parent=1 // pred_fallthru
      _
    %257 = vsyncpa [#allocation4], 1
    %258 = vsyncpa [#allocation7], 1
    %259 = vsyncpa [#allocation5], 1

</llo_original>
